<compile_context>
chip_gen: v5e
topology: v5e:2x2
jax: 0.10.0
libtpu: 0.0.40
codegen_flags: <defaults>
</compile_context>

<pallas_src>
import jax
import jax.numpy as jnp
from jax.experimental import pallas as pl
from jax.experimental.pallas import tpu as pltpu  # noqa: F401  (TPU backend)

BN_EPS = 1e-5


# --------------------------------------------------------------------------
# Fused kernel: conv(3x3, pad=1, no bias) + BatchNorm2d(batch stats) + ReLU + x
#   p_ref : (B, K, M)  im2col patches, K = 9*C on sublane, M = H*W on lane
#   w_ref : (C, K)     conv weight flattened in (c_in, kh, kw) order
#   g_ref : (C, 1)     BN gamma
#   b_ref : (C, 1)     BN beta
#   x_ref : (B, C, M)  residual input (same layout as output)
#   o_ref : (B, C, M)
# --------------------------------------------------------------------------
def _resblock_kernel(p_ref, w_ref, g_ref, b_ref, x_ref, o_ref):
    # conv as (C,K)@(K,M) batched over B -> lane-dense (B, C, M) result
    y = jnp.einsum('ck,bkm->bcm', w_ref[...], p_ref[...],
                   preferred_element_type=jnp.float32)

    # BatchNorm2d, training-mode batch statistics, biased variance, one pass.
    mean = jnp.mean(y, axis=(0, 2), keepdims=True)          # (1, C, 1)
    mean_sq = jnp.mean(y * y, axis=(0, 2), keepdims=True)   # (1, C, 1)
    var = mean_sq - mean * mean
    y = (y - mean) * jax.lax.rsqrt(var + BN_EPS)             # EUP rsqrt
    y = y * g_ref[...] + b_ref[...]                           # (C,1) broadcasts

    # ReLU + residual, single unmasked lane-dense store.
    o_ref[...] = jnp.maximum(y, 0.0) + x_ref[...]


def resblock_forward(x_nchw, conv_w, bn_gamma, bn_beta):
    """x_nchw: (B, C, H, W) f32; conv_w: (C, C, 3, 3); gamma/beta: (C,)."""
    B, C, H, W = x_nchw.shape
    M = H * W
    K = 9 * C

    # --- tiny plain-JAX glue: im2col (3x3, pad=1), K ordered (c_in, kh, kw) ---
    xp = jnp.pad(x_nchw, ((0, 0), (0, 0), (1, 1), (1, 1)))
    cols = [xp[:, :, kh:kh + H, kw:kw + W] for kh in range(3) for kw in range(3)]
    patches = jnp.stack(cols, axis=2).reshape(B, K, M)        # (B, 9*C, H*W)

    # (C_out, C_in, 3, 3) -> (C_out, C_in*9): same (c_in, kh, kw) order as patches
    w_mat = conv_w.reshape(C, K)
    x_res = x_nchw.reshape(B, C, M)                           # pure reshape (NCHW)

    out = pl.pallas_call(
        _resblock_kernel,
        out_shape=jax.ShapeDtypeStruct((B, C, M), jnp.float32),
        grid=(1,),
        in_specs=[
            pl.BlockSpec((B, K, M), lambda i: (0, 0, 0)),
            pl.BlockSpec((C, K), lambda i: (0, 0)),
            pl.BlockSpec((C, 1), lambda i: (0, 0)),
            pl.BlockSpec((C, 1), lambda i: (0, 0)),
            pl.BlockSpec((B, C, M), lambda i: (0, 0, 0)),
        ],
        out_specs=pl.BlockSpec((B, C, M), lambda i: (0, 0, 0)),
    )(patches, w_mat, bn_gamma.reshape(C, 1), bn_beta.reshape(C, 1), x_res)

    return out.reshape(B, C, H, W)                            # pure reshape back


# --------------------------------------------------------------------------
# Pure-JAX reference (for in-script correctness check)
# --------------------------------------------------------------------------
def resblock_ref(x, w, g, b):
    y = jax.lax.conv_general_dilated(
        x, w, window_strides=(1, 1), padding='SAME',
        dimension_numbers=('NCHW', 'OIHW', 'NCHW'),
        precision=jax.lax.Precision.HIGHEST)
    mean = jnp.mean(y, axis=(0, 2, 3), keepdims=True)
    var = jnp.mean((y - mean) ** 2, axis=(0, 2, 3), keepdims=True)
    y = (y - mean) * jax.lax.rsqrt(var + BN_EPS)
    y = y * g.reshape(1, -1, 1, 1) + b.reshape(1, -1, 1, 1)
    return jnp.maximum(y, 0.0) + x


if __name__ == "__main__":
    key = jax.random.PRNGKey(0)
    kx, kw = jax.random.split(key)

    B, C, H, W = 2, 4, 16, 16
    x = jax.random.normal(kx, (B, C, H, W), jnp.float32)

    # kaiming_normal_(nonlinearity='relu'): std = sqrt(2 / fan_in), fan_in = C*3*3
    fan_in = C * 3 * 3
    conv_w = jax.random.normal(kw, (C, C, 3, 3), jnp.float32) * jnp.sqrt(2.0 / fan_in)
    bn_gamma = jnp.full((C,), 0.5, jnp.float32)   # constant_(bn.weight, 0.5)
    bn_beta = jnp.zeros((C,), jnp.float32)        # zeros_(bn.bias)

    out = jax.jit(resblock_forward)(x, conv_w, bn_gamma, bn_beta)
    out = jax.block_until_ready(out)

    assert out.shape == (B, C, H, W)
    assert bool(jnp.all(jnp.isfinite(out)))

    ref = resblock_ref(x, conv_w, bn_gamma, bn_beta)
    max_err = float(jnp.max(jnp.abs(out - ref)))
    assert max_err < 5e-2, f"mismatch vs reference: {max_err}"

    print("KERNEL_OK")
</pallas_src>

<mosaic_0001>
module attributes {stable_mosaic.version = 11 : i64} {
  func.func @_resblock_kernel(%arg0: i32, %arg1: memref<2x36x256xf32, #tpu.memory_space<vmem>>, %arg2: memref<4x36xf32, #tpu.memory_space<vmem>>, %arg3: memref<4x1xf32, #tpu.memory_space<vmem>>, %arg4: memref<4x1xf32, #tpu.memory_space<vmem>>, %arg5: memref<2x4x256xf32, #tpu.memory_space<vmem>>, %arg6: memref<2x4x256xf32, #tpu.memory_space<vmem>>) attributes {dimension_semantics = [#tpu.dimension_semantics<arbitrary>], iteration_bounds = array<i64: 1>, scalar_prefetch = 0 : i64, scratch_operands = 0 : i64, tpu.core_type = #tpu.core_type<tc>, window_params = [{pipeline_mode = #tpu.pipeline_mode<synchronous>, transform_indices = @transform_0, window_bounds = array<i64: 2, 36, 256>}, {pipeline_mode = #tpu.pipeline_mode<synchronous>, transform_indices = @transform_1, window_bounds = array<i64: 4, 36>}, {pipeline_mode = #tpu.pipeline_mode<synchronous>, transform_indices = @transform_2, window_bounds = array<i64: 4, 1>}, {pipeline_mode = #tpu.pipeline_mode<synchronous>, transform_indices = @transform_3, window_bounds = array<i64: 4, 1>}, {pipeline_mode = #tpu.pipeline_mode<synchronous>, transform_indices = @transform_4, window_bounds = array<i64: 2, 4, 256>}, {pipeline_mode = #tpu.pipeline_mode<synchronous>, transform_indices = @transform_5, window_bounds = array<i64: 2, 4, 256>}]} {
    %c0 = arith.constant 0 : index
    %c0_0 = arith.constant 0 : index
    %0 = vector.load %arg2[%c0, %c0_0] : memref<4x36xf32, #tpu.memory_space<vmem>>, vector<4x36xf32>
    %c0_1 = arith.constant 0 : index
    %c0_2 = arith.constant 0 : index
    %c0_3 = arith.constant 0 : index
    %1 = vector.load %arg1[%c0_1, %c0_2, %c0_3] : memref<2x36x256xf32, #tpu.memory_space<vmem>>, vector<2x36x256xf32>
    "tpu.trace_start"() <{level = 10 : i32, message = "ck,bkm->bcm"}> : () -> ()
    %cst = arith.constant dense<0.000000e+00> : vector<2x256x4xf32>
    %2 = tpu.matmul %1, %0, %cst {dimension_numbers = #tpu.dot_dimension_numbers<[1], [1], [0, 2], [0], [0, 0, 0, 2, 1, 0], [], []>} : vector<2x36x256xf32>, vector<4x36xf32>, vector<2x256x4xf32> -> vector<2x256x4xf32>
    %3 = tpu.transpose %2, [0, 2, 1] : vector<2x256x4xf32> -> vector<2x4x256xf32>
    "tpu.trace_stop"() : () -> ()
    %cst_4 = arith.constant dense<0.000000e+00> : vector<4xf32>
    %4 = vector.multi_reduction <add>, %3, %cst_4 [0, 2] : vector<2x4x256xf32> to vector<4xf32>
    %5 = vector.shape_cast %4 : vector<4xf32> to vector<1x4x1xf32>
    %cst_5 = arith.constant 5.120000e+02 : f32
    %6 = vector.broadcast %cst_5 : f32 to vector<1x4x1xf32>
    %7 = arith.divf %5, %6 : vector<1x4x1xf32>
    %8 = arith.mulf %3, %3 : vector<2x4x256xf32>
    %cst_6 = arith.constant dense<0.000000e+00> : vector<4xf32>
    %9 = vector.multi_reduction <add>, %8, %cst_6 [0, 2] : vector<2x4x256xf32> to vector<4xf32>
    %10 = vector.shape_cast %9 : vector<4xf32> to vector<1x4x1xf32>
    %cst_7 = arith.constant 5.120000e+02 : f32
    %11 = vector.broadcast %cst_7 : f32 to vector<1x4x1xf32>
    %12 = arith.divf %10, %11 : vector<1x4x1xf32>
    %13 = arith.mulf %7, %7 : vector<1x4x1xf32>
    %14 = arith.subf %12, %13 : vector<1x4x1xf32>
    %15 = vector.broadcast %7 : vector<1x4x1xf32> to vector<2x4x256xf32>
    %16 = arith.subf %3, %15 : vector<2x4x256xf32>
    %cst_8 = arith.constant 9.99999974E-6 : f32
    %17 = vector.broadcast %cst_8 : f32 to vector<1x4x1xf32>
    %18 = arith.addf %14, %17 : vector<1x4x1xf32>
    %19 = math.rsqrt %18 : vector<1x4x1xf32>
    %20 = vector.broadcast %19 : vector<1x4x1xf32> to vector<2x4x256xf32>
    %21 = arith.mulf %16, %20 : vector<2x4x256xf32>
    %c0_9 = arith.constant 0 : index
    %c0_10 = arith.constant 0 : index
    %22 = vector.load %arg3[%c0_9, %c0_10] : memref<4x1xf32, #tpu.memory_space<vmem>>, vector<4x1xf32>
    %23 = vector.shape_cast %22 : vector<4x1xf32> to vector<1x4x1xf32>
    %24 = vector.broadcast %23 : vector<1x4x1xf32> to vector<2x4x256xf32>
    %25 = arith.mulf %21, %24 : vector<2x4x256xf32>
    %c0_11 = arith.constant 0 : index
    %c0_12 = arith.constant 0 : index
    %26 = vector.load %arg4[%c0_11, %c0_12] : memref<4x1xf32, #tpu.memory_space<vmem>>, vector<4x1xf32>
    %27 = vector.shape_cast %26 : vector<4x1xf32> to vector<1x4x1xf32>
    %28 = vector.broadcast %27 : vector<1x4x1xf32> to vector<2x4x256xf32>
    %29 = arith.addf %25, %28 : vector<2x4x256xf32>
    %cst_13 = arith.constant 0.000000e+00 : f32
    %30 = vector.broadcast %cst_13 : f32 to vector<2x4x256xf32>
    %31 = arith.maximumf %29, %30 : vector<2x4x256xf32>
    %c0_14 = arith.constant 0 : index
    %c0_15 = arith.constant 0 : index
    %c0_16 = arith.constant 0 : index
    %32 = vector.load %arg5[%c0_14, %c0_15, %c0_16] : memref<2x4x256xf32, #tpu.memory_space<vmem>>, vector<2x4x256xf32>
    %33 = arith.addf %31, %32 : vector<2x4x256xf32>
    %c0_17 = arith.constant 0 : index
    %c0_18 = arith.constant 0 : index
    %c0_19 = arith.constant 0 : index
    %34 = vector.load %arg6[%c0_17, %c0_18, %c0_19] : memref<2x4x256xf32, #tpu.memory_space<vmem>>, vector<2x4x256xf32>
    tpu.vector_store %arg6[%c0_17, %c0_18, %c0_19], %33 {strides = array<i32>} : memref<2x4x256xf32, #tpu.memory_space<vmem>>, vector<2x4x256xf32>,
    return
  }
  func.func @transform_0(%arg0: i32) -> (i32, i32, i32) {
    %c0_i32 = arith.constant 0 : i32
    %c0_i32_0 = arith.constant 0 : i32
    %c0_i32_1 = arith.constant 0 : i32
    %c0_i32_2 = arith.constant 0 : i32
    return %c0_i32, %c0_i32_0, %c0_i32_1 : i32, i32, i32
  }
  func.func @transform_1(%arg0: i32) -> (i32, i32) {
    %c0_i32 = arith.constant 0 : i32
    %c0_i32_0 = arith.constant 0 : i32
    %c0_i32_1 = arith.constant 0 : i32
    return %c0_i32, %c0_i32_0 : i32, i32
  }
  func.func @transform_2(%arg0: i32) -> (i32, i32) {
    %c0_i32 = arith.constant 0 : i32
    %c0_i32_0 = arith.constant 0 : i32
    %c0_i32_1 = arith.constant 0 : i32
    return %c0_i32, %c0_i32_0 : i32, i32
  }
  func.func @transform_3(%arg0: i32) -> (i32, i32) {
    %c0_i32 = arith.constant 0 : i32
    %c0_i32_0 = arith.constant 0 : i32
    %c0_i32_1 = arith.constant 0 : i32
    return %c0_i32, %c0_i32_0 : i32, i32
  }
  func.func @transform_4(%arg0: i32) -> (i32, i32, i32) {
    %c0_i32 = arith.constant 0 : i32
    %c0_i32_0 = arith.constant 0 : i32
    %c0_i32_1 = arith.constant 0 : i32
    %c0_i32_2 = arith.constant 0 : i32
    return %c0_i32, %c0_i32_0, %c0_i32_1 : i32, i32, i32
  }
  func.func @transform_5(%arg0: i32) -> (i32, i32, i32) {
    %c0_i32 = arith.constant 0 : i32
    %c0_i32_0 = arith.constant 0 : i32
    %c0_i32_1 = arith.constant 0 : i32
    %c0_i32_2 = arith.constant 0 : i32
    return %c0_i32, %c0_i32_0, %c0_i32_1 : i32, i32, i32
  }
}

</mosaic_0001>

<llo_original>
// kernel: resblock_forward.1
$region0: #{resblock_forward.1}
  #allocation0 [shape = 'u32[]', space=smem, size = 0x4, offset = 0x4, fixed_abs, tag = 'smem constant byte address 0x4 - core index']
  #allocation1 [shape = 'u32[72,128]{1,0:T(1,128)}', space=vmem, size = 0x9000, scoped, tag = 'internal scratch']
  %s0 = inlined_call_operand.vmem [shape: f32[2,36,256], index: 0, kind: input, shape index: {}]
  %s1 = inlined_call_operand.vmem [shape: f32[4,36], index: 1, kind: input, shape index: {}]
  %s2 = inlined_call_operand.vmem [shape: f32[4,1], index: 2, kind: input, shape index: {}]
  %s3 = inlined_call_operand.vmem [shape: f32[4,1], index: 3, kind: input, shape index: {}]
  %s4 = inlined_call_operand.vmem [shape: f32[2,4,256], index: 4, kind: input, shape index: {}]
  %s5 = inlined_call_operand.vmem [shape: f32[2,4,256], index: 5, kind: output, shape index: {}]
  %s6 = sld [smem:[#allocation0]]
  $region30: #{resblock_forward.1} parent=0
    _
  %s8 = ssub.s32 1, %s6
  %s9 = scalar_select 0, %s8, %s6
  // Predicated region
  $region2: #{resblock_forward.1} parent=0 // pred_check
    _
  $region3: #{resblock_forward.1} parent=0 // pred_check_branch
    %11 = sbr.rel (0) target = $region5
  $region4: #{resblock_forward.1} parent=0 // pred_region
    _
  $region5: #{resblock_forward.1} parent=0 // pred_fallthru
    _
  // Predicated region
  $region6: #{resblock_forward.1} parent=0 // pred_check
    _
  $region7: #{resblock_forward.1} parent=0 // pred_check_branch
    %13 = sbr.rel (0) target = $region9
  $region8: #{resblock_forward.1} parent=0 // pred_region
    _
  $region9: #{resblock_forward.1} parent=0 // pred_fallthru
    _
  // Predicated region
  $region10: #{resblock_forward.1} parent=0 // pred_check
    _
  $region11: #{resblock_forward.1} parent=0 // pred_check_branch
    %15 = sbr.rel (0) target = $region13
  $region12: #{resblock_forward.1} parent=0 // pred_region
    _
  $region13: #{resblock_forward.1} parent=0 // pred_fallthru
    _
  // Predicated region
  $region14: #{resblock_forward.1} parent=0 // pred_check
    _
  $region15: #{resblock_forward.1} parent=0 // pred_check_branch
    %17 = sbr.rel (0) target = $region17
  $region16: #{resblock_forward.1} parent=0 // pred_region
    _
  $region17: #{resblock_forward.1} parent=0 // pred_fallthru
    _
  // Predicated region
  $region18: #{resblock_forward.1} parent=0 // pred_check
    _
  $region19: #{resblock_forward.1} parent=0 // pred_check_branch
    %19 = sbr.rel (0) target = $region21
  $region20: #{resblock_forward.1} parent=0 // pred_region
    _
  $region21: #{resblock_forward.1} parent=0 // pred_fallthru
    _
  %v20 = vld [vmem:[%s1] sm:$0xf]
  %v21 = vld [vmem:[%s0] sm:$0xff]
  %v22 = vld [vmem:[%s0 + $0x8] sm:$0xff]
  %v23 = vld [vmem:[%s0 + $0x10] sm:$0xff]
  %v24 = vld [vmem:[%s0 + $0x18] sm:$0xff]
  %v25 = vld [vmem:[%s0 + $0x20] sm:$0xff]
  %v26 = vld [vmem:[%s0 + $0x28] sm:$0xff]
  %v27 = vld [vmem:[%s0 + $0x30] sm:$0xff]
  %v28 = vld [vmem:[%s0 + $0x38] sm:$0xff]
  %v29 = vld [vmem:[%s0 + $0x40] sm:$0xf]
  %v30 = vld [vmem:[%s0 + $0x48] sm:$0xf]
  %v31 = vld [vmem:[%s0 + $0x50] sm:$0xff]
  %v32 = vld [vmem:[%s0 + $0x58] sm:$0xff]
  %v33 = vld [vmem:[%s0 + $0x60] sm:$0xff]
  %v34 = vld [vmem:[%s0 + $0x68] sm:$0xff]
  %v35 = vld [vmem:[%s0 + $0x70] sm:$0xff]
  %v36 = vld [vmem:[%s0 + $0x78] sm:$0xff]
  %v37 = vld [vmem:[%s0 + $0x80] sm:$0xff]
  %v38 = vld [vmem:[%s0 + $0x88] sm:$0xff]
  %v39 = vld [vmem:[%s0 + $0x90] sm:$0xf]
  %v40 = vld [vmem:[%s0 + $0x98] sm:$0xf]
  %41 = vxpose.xlu0.b32.start [1/16] %v21, 128
  %42 = vxpose.xlu0.b32.cont [2/16] %v23, 128
  %43 = vxpose.xlu0.b32.cont [3/16] %v25, 128
  %44 = vxpose.xlu0.b32.cont [4/16] %v27, 128
  %45 = vxpose.xlu0.b32.cont [5/16] %v29, 128
  %46 = vxpose.xlu0.b32.cont [6/16] 0.0, 128
  %47 = vxpose.xlu0.b32.cont [7/16] 0.0, 128
  %48 = vxpose.xlu0.b32.cont [8/16] 0.0, 128
  %49 = vxpose.xlu0.b32.cont [9/16] 0.0, 128
  %50 = vxpose.xlu0.b32.cont [10/16] 0.0, 128
  %51 = vxpose.xlu0.b32.cont [11/16] 0.0, 128
  %52 = vxpose.xlu0.b32.cont [12/16] 0.0, 128
  %53 = vxpose.xlu0.b32.cont [13/16] 0.0, 128
  %54 = vxpose.xlu0.b32.cont [14/16] 0.0, 128
  %55 = vxpose.xlu0.b32.cont [15/16] 0.0, 128
  %56 = vxpose.xlu0.b32.end [16/16] 0.0, 128
  %v57 = vpop.trf.xlu0
  %v58 = vpop.trf.xlu0
  %v59 = vpop.trf.xlu0
  %v60 = vpop.trf.xlu0
  %v61 = vpop.trf.xlu0
  %v62 = vpop.trf.xlu0
  %v63 = vpop.trf.xlu0
  %v64 = vpop.trf.xlu0
  %v65 = vpop.trf.xlu0
  %v66 = vpop.trf.xlu0
  %v67 = vpop.trf.xlu0
  %v68 = vpop.trf.xlu0
  %v69 = vpop.trf.xlu0
  %v70 = vpop.trf.xlu0
  %v71 = vpop.trf.xlu0
  %v72 = vpop.trf.xlu0
  %73 = vxpose.xlu0.b32.start [1/16] %v22, 128
  %74 = vxpose.xlu0.b32.cont [2/16] %v24, 128
  %75 = vxpose.xlu0.b32.cont [3/16] %v26, 128
  %76 = vxpose.xlu0.b32.cont [4/16] %v28, 128
  %77 = vxpose.xlu0.b32.cont [5/16] %v30, 128
  %78 = vxpose.xlu0.b32.cont [6/16] 0.0, 128
  %79 = vxpose.xlu0.b32.cont [7/16] 0.0, 128
  %80 = vxpose.xlu0.b32.cont [8/16] 0.0, 128
  %81 = vxpose.xlu0.b32.cont [9/16] 0.0, 128
  %82 = vxpose.xlu0.b32.cont [10/16] 0.0, 128
  %83 = vxpose.xlu0.b32.cont [11/16] 0.0, 128
  %84 = vxpose.xlu0.b32.cont [12/16] 0.0, 128
  %85 = vxpose.xlu0.b32.cont [13/16] 0.0, 128
  %86 = vxpose.xlu0.b32.cont [14/16] 0.0, 128
  %87 = vxpose.xlu0.b32.cont [15/16] 0.0, 128
  %88 = vxpose.xlu0.b32.end [16/16] 0.0, 128
  %v89 = vpop.trf.xlu0
  %v90 = vpop.trf.xlu0
  %v91 = vpop.trf.xlu0
  %v92 = vpop.trf.xlu0
  %v93 = vpop.trf.xlu0
  %v94 = vpop.trf.xlu0
  %v95 = vpop.trf.xlu0
  %v96 = vpop.trf.xlu0
  %v97 = vpop.trf.xlu0
  %v98 = vpop.trf.xlu0
  %v99 = vpop.trf.xlu0
  %v100 = vpop.trf.xlu0
  %v101 = vpop.trf.xlu0
  %v102 = vpop.trf.xlu0
  %v103 = vpop.trf.xlu0
  %v104 = vpop.trf.xlu0
  %105 = vxpose.xlu0.b32.start [1/16] %v31, 128
  %106 = vxpose.xlu0.b32.cont [2/16] %v33, 128
  %107 = vxpose.xlu0.b32.cont [3/16] %v35, 128
  %108 = vxpose.xlu0.b32.cont [4/16] %v37, 128
  %109 = vxpose.xlu0.b32.cont [5/16] %v39, 128
  %110 = vxpose.xlu0.b32.cont [6/16] 0.0, 128
  %111 = vxpose.xlu0.b32.cont [7/16] 0.0, 128
  %112 = vxpose.xlu0.b32.cont [8/16] 0.0, 128
  %113 = vxpose.xlu0.b32.cont [9/16] 0.0, 128
  %114 = vxpose.xlu0.b32.cont [10/16] 0.0, 128
  %115 = vxpose.xlu0.b32.cont [11/16] 0.0, 128
  %116 = vxpose.xlu0.b32.cont [12/16] 0.0, 128
  %117 = vxpose.xlu0.b32.cont [13/16] 0.0, 128
  %118 = vxpose.xlu0.b32.cont [14/16] 0.0, 128
  %119 = vxpose.xlu0.b32.cont [15/16] 0.0, 128
  %120 = vxpose.xlu0.b32.end [16/16] 0.0, 128
  %v121 = vpop.trf.xlu0
  %v122 = vpop.trf.xlu0
  %v123 = vpop.trf.xlu0
  %v124 = vpop.trf.xlu0
  %v125 = vpop.trf.xlu0
  %v126 = vpop.trf.xlu0
  %v127 = vpop.trf.xlu0
  %v128 = vpop.trf.xlu0
  %v129 = vpop.trf.xlu0
  %v130 = vpop.trf.xlu0
  %v131 = vpop.trf.xlu0
  %v132 = vpop.trf.xlu0
  %v133 = vpop.trf.xlu0
  %v134 = vpop.trf.xlu0
  %v135 = vpop.trf.xlu0
  %v136 = vpop.trf.xlu0
  %137 = vxpose.xlu0.b32.start [1/16] %v32, 128
  %138 = vxpose.xlu0.b32.cont [2/16] %v34, 128
  %139 = vxpose.xlu0.b32.cont [3/16] %v36, 128
  %140 = vxpose.xlu0.b32.cont [4/16] %v38, 128
  %141 = vxpose.xlu0.b32.cont [5/16] %v40, 128
  %142 = vxpose.xlu0.b32.cont [6/16] 0.0, 128
  %143 = vxpose.xlu0.b32.cont [7/16] 0.0, 128
  %144 = vxpose.xlu0.b32.cont [8/16] 0.0, 128
  %145 = vxpose.xlu0.b32.cont [9/16] 0.0, 128
  %146 = vxpose.xlu0.b32.cont [10/16] 0.0, 128
  %147 = vxpose.xlu0.b32.cont [11/16] 0.0, 128
  %148 = vxpose.xlu0.b32.cont [12/16] 0.0, 128
  %149 = vxpose.xlu0.b32.cont [13/16] 0.0, 128
  %150 = vxpose.xlu0.b32.cont [14/16] 0.0, 128
  %151 = vxpose.xlu0.b32.cont [15/16] 0.0, 128
  %152 = vxpose.xlu0.b32.end [16/16] 0.0, 128
  %v153 = vpop.trf.xlu0
  %v154 = vpop.trf.xlu0
  %v155 = vpop.trf.xlu0
  %v156 = vpop.trf.xlu0
  %v157 = vpop.trf.xlu0
  %v158 = vpop.trf.xlu0
  %v159 = vpop.trf.xlu0
  %v160 = vpop.trf.xlu0
  %v161 = vpop.trf.xlu0
  %v162 = vpop.trf.xlu0
  %v163 = vpop.trf.xlu0
  %v164 = vpop.trf.xlu0
  %v165 = vpop.trf.xlu0
  %v166 = vpop.trf.xlu0
  %v167 = vpop.trf.xlu0
  %v168 = vpop.trf.xlu0
  %vm169 = vcmask 293888
  %v171 = vsel %vm169, %v57, 0
  %v174 = vsel %vm169, %v58, 0
  %v177 = vsel %vm169, %v59, 0
  %v180 = vsel %vm169, %v60, 0
  %v183 = vsel %vm169, %v61, 0
  %v186 = vsel %vm169, %v62, 0
  %v189 = vsel %vm169, %v63, 0
  %v192 = vsel %vm169, %v64, 0
  %v195 = vsel %vm169, %v65, 0
  %v198 = vsel %vm169, %v66, 0
  %v201 = vsel %vm169, %v67, 0
  %v204 = vsel %vm169, %v68, 0
  %v207 = vsel %vm169, %v69, 0
  %v210 = vsel %vm169, %v70, 0
  %v213 = vsel %vm169, %v71, 0
  %v216 = vsel %vm169, %v72, 0
  %v219 = vsel %vm169, %v89, 0
  %v222 = vsel %vm169, %v90, 0
  %v225 = vsel %vm169, %v91, 0
  %v228 = vsel %vm169, %v92, 0
  %v231 = vsel %vm169, %v93, 0
  %v234 = vsel %vm169, %v94, 0
  %v237 = vsel %vm169, %v95, 0
  %v240 = vsel %vm169, %v96, 0
  %v243 = vsel %vm169, %v97, 0
  %v246 = vsel %vm169, %v98, 0
  %v249 = vsel %vm169, %v99, 0
  %v252 = vsel %vm169, %v100, 0
  %v255 = vsel %vm169, %v101, 0
  %v258 = vsel %vm169, %v102, 0
  %v261 = vsel %vm169, %v103, 0
  %v264 = vsel %vm169, %v104, 0
  %v267 = vsel %vm169, %v121, 0
  %v270 = vsel %vm169, %v122, 0
  %v273 = vsel %vm169, %v123, 0
  %v276 = vsel %vm169, %v124, 0
  %v279 = vsel %vm169, %v125, 0
  %v282 = vsel %vm169, %v126, 0
  %v285 = vsel %vm169, %v127, 0
  %v288 = vsel %vm169, %v128, 0
  %v291 = vsel %vm169, %v129, 0
  %v294 = vsel %vm169, %v130, 0
  %v297 = vsel %vm169, %v131, 0
  %v300 = vsel %vm169, %v132, 0
  %v303 = vsel %vm169, %v133, 0
  %v306 = vsel %vm169, %v134, 0
  %v309 = vsel %vm169, %v135, 0
  %v312 = vsel %vm169, %v136, 0
  %v315 = vsel %vm169, %v153, 0
  %v318 = vsel %vm169, %v154, 0
  %v321 = vsel %vm169, %v155, 0
  %v324 = vsel %vm169, %v156, 0
  %v327 = vsel %vm169, %v157, 0
  %v330 = vsel %vm169, %v158, 0
  %v333 = vsel %vm169, %v159, 0
  %v336 = vsel %vm169, %v160, 0
  %v339 = vsel %vm169, %v161, 0
  %v342 = vsel %vm169, %v162, 0
  %v345 = vsel %vm169, %v163, 0
  %v348 = vsel %vm169, %v164, 0
  %v351 = vsel %vm169, %v165, 0
  %v354 = vsel %vm169, %v166, 0
  %v357 = vsel %vm169, %v167, 0
  %v360 = vsel %vm169, %v168, 0
  %v363 = vsel %vm169, %v20, 0
  %365 = vmatpush.xpose.msra.mxu0 0.0
  %366 = vmatpush.xpose.msra.mxu0 0.0
  %367 = vmatpush.xpose.msra.mxu0 0.0
  %368 = vmatpush.xpose.msra.mxu0 0.0
  %369 = vmatpush.xpose.msra.mxu0 0.0
  %370 = vmatpush.xpose.msra.mxu0 0.0
  %371 = vmatpush.xpose.msra.mxu0 0.0
  %372 = vmatpush.xpose.msra.mxu0 0.0
  %373 = vmatpush.xpose.msra.mxu0 0.0
  %374 = vmatpush.xpose.msra.mxu0 0.0
  %375 = vmatpush.xpose.msra.mxu0 0.0
  %376 = vmatpush.xpose.msra.mxu0 0.0
  %377 = vmatpush.xpose.msra.mxu0 0.0
  %378 = vmatpush.xpose.msra.mxu0 0.0
  %379 = vmatpush.xpose.msra.mxu0 0.0
  %380 = vmatpush.xpose.msra.mxu0 %v363
  %381 = vmatmul.f32.gmra.mxu0 %v171
  %v382 = vpop.f32.mrf.mxu0
  %v383 = vadd.f32 0.0, %v382
  %384 = vmatmul.f32.gmra.mxu0 %v174
  %v385 = vpop.f32.mrf.mxu0
  %v386 = vadd.f32 0.0, %v385
  %387 = vmatmul.f32.gmra.mxu0 %v177
  %v388 = vpop.f32.mrf.mxu0
  %v389 = vadd.f32 0.0, %v388
  %390 = vmatmul.f32.gmra.mxu0 %v180
  %v391 = vpop.f32.mrf.mxu0
  %v392 = vadd.f32 0.0, %v391
  %393 = vmatmul.f32.gmra.mxu0 %v183
  %v394 = vpop.f32.mrf.mxu0
  %v395 = vadd.f32 0.0, %v394
  %396 = vmatmul.f32.gmra.mxu0 %v186
  %v397 = vpop.f32.mrf.mxu0
  %v398 = vadd.f32 0.0, %v397
  %399 = vmatmul.f32.gmra.mxu0 %v189
  %v400 = vpop.f32.mrf.mxu0
  %v401 = vadd.f32 0.0, %v400
  %402 = vmatmul.f32.gmra.mxu0 %v192
  %v403 = vpop.f32.mrf.mxu0
  %v404 = vadd.f32 0.0, %v403
  %405 = vmatmul.f32.gmra.mxu0 %v195
  %v406 = vpop.f32.mrf.mxu0
  %v407 = vadd.f32 0.0, %v406
  %408 = vmatmul.f32.gmra.mxu0 %v198
  %v409 = vpop.f32.mrf.mxu0
  %v410 = vadd.f32 0.0, %v409
  %411 = vmatmul.f32.gmra.mxu0 %v201
  %v412 = vpop.f32.mrf.mxu0
  %v413 = vadd.f32 0.0, %v412
  %414 = vmatmul.f32.gmra.mxu0 %v204
  %v415 = vpop.f32.mrf.mxu0
  %v416 = vadd.f32 0.0, %v415
  %417 = vmatmul.f32.gmra.mxu0 %v207
  %v418 = vpop.f32.mrf.mxu0
  %v419 = vadd.f32 0.0, %v418
  %420 = vmatmul.f32.gmra.mxu0 %v210
  %v421 = vpop.f32.mrf.mxu0
  %v422 = vadd.f32 0.0, %v421
  %423 = vmatmul.f32.gmra.mxu0 %v213
  %v424 = vpop.f32.mrf.mxu0
  %v425 = vadd.f32 0.0, %v424
  %426 = vmatmul.f32.gmra.mxu0 %v216
  %v427 = vpop.f32.mrf.mxu0
  %v428 = vadd.f32 0.0, %v427
  %429 = vmatmul.f32.gmra.mxu0 %v219
  %v430 = vpop.f32.mrf.mxu0
  %v431 = vadd.f32 0.0, %v430
  %432 = vmatmul.f32.gmra.mxu0 %v222
  %v433 = vpop.f32.mrf.mxu0
  %v434 = vadd.f32 0.0, %v433
  %435 = vmatmul.f32.gmra.mxu0 %v225
  %v436 = vpop.f32.mrf.mxu0
  %v437 = vadd.f32 0.0, %v436
  %438 = vmatmul.f32.gmra.mxu0 %v228
  %v439 = vpop.f32.mrf.mxu0
  %v440 = vadd.f32 0.0, %v439
  %441 = vmatmul.f32.gmra.mxu0 %v231
  %v442 = vpop.f32.mrf.mxu0
  %v443 = vadd.f32 0.0, %v442
  %444 = vmatmul.f32.gmra.mxu0 %v234
  %v445 = vpop.f32.mrf.mxu0
  %v446 = vadd.f32 0.0, %v445
  %447 = vmatmul.f32.gmra.mxu0 %v237
  %v448 = vpop.f32.mrf.mxu0
  %v449 = vadd.f32 0.0, %v448
  %450 = vmatmul.f32.gmra.mxu0 %v240
  %v451 = vpop.f32.mrf.mxu0
  %v452 = vadd.f32 0.0, %v451
  %453 = vmatmul.f32.gmra.mxu0 %v243
  %v454 = vpop.f32.mrf.mxu0
  %v455 = vadd.f32 0.0, %v454
  %456 = vmatmul.f32.gmra.mxu0 %v246
  %v457 = vpop.f32.mrf.mxu0
  %v458 = vadd.f32 0.0, %v457
  %459 = vmatmul.f32.gmra.mxu0 %v249
  %v460 = vpop.f32.mrf.mxu0
  %v461 = vadd.f32 0.0, %v460
  %462 = vmatmul.f32.gmra.mxu0 %v252
  %v463 = vpop.f32.mrf.mxu0
  %v464 = vadd.f32 0.0, %v463
  %465 = vmatmul.f32.gmra.mxu0 %v255
  %v466 = vpop.f32.mrf.mxu0
  %v467 = vadd.f32 0.0, %v466
  %468 = vmatmul.f32.gmra.mxu0 %v258
  %v469 = vpop.f32.mrf.mxu0
  %v470 = vadd.f32 0.0, %v469
  %471 = vmatmul.f32.gmra.mxu0 %v261
  %v472 = vpop.f32.mrf.mxu0
  %v473 = vadd.f32 0.0, %v472
  %474 = vmatmul.f32.gmra.mxu0 %v264
  %v475 = vpop.f32.mrf.mxu0
  %v476 = vadd.f32 0.0, %v475
  %477 = vmatmul.f32.gmra.mxu0 %v267
  %v478 = vpop.f32.mrf.mxu0
  %v479 = vadd.f32 0.0, %v478
  %480 = vmatmul.f32.gmra.mxu0 %v270
  %v481 = vpop.f32.mrf.mxu0
  %v482 = vadd.f32 0.0, %v481
  %483 = vmatmul.f32.gmra.mxu0 %v273
  %v484 = vpop.f32.mrf.mxu0
  %v485 = vadd.f32 0.0, %v484
  %486 = vmatmul.f32.gmra.mxu0 %v276
  %v487 = vpop.f32.mrf.mxu0
  %v488 = vadd.f32 0.0, %v487
  %489 = vmatmul.f32.gmra.mxu0 %v279
  %v490 = vpop.f32.mrf.mxu0
  %v491 = vadd.f32 0.0, %v490
  %492 = vmatmul.f32.gmra.mxu0 %v282
  %v493 = vpop.f32.mrf.mxu0
  %v494 = vadd.f32 0.0, %v493
  %495 = vmatmul.f32.gmra.mxu0 %v285
  %v496 = vpop.f32.mrf.mxu0
  %v497 = vadd.f32 0.0, %v496
  %498 = vmatmul.f32.gmra.mxu0 %v288
  %v499 = vpop.f32.mrf.mxu0
  %v500 = vadd.f32 0.0, %v499
  %501 = vmatmul.f32.gmra.mxu0 %v291
  %v502 = vpop.f32.mrf.mxu0
  %v503 = vadd.f32 0.0, %v502
  %504 = vmatmul.f32.gmra.mxu0 %v294
  %v505 = vpop.f32.mrf.mxu0
  %v506 = vadd.f32 0.0, %v505
  %507 = vmatmul.f32.gmra.mxu0 %v297
  %v508 = vpop.f32.mrf.mxu0
  %v509 = vadd.f32 0.0, %v508
  %510 = vmatmul.f32.gmra.mxu0 %v300
  %v511 = vpop.f32.mrf.mxu0
  %v512 = vadd.f32 0.0, %v511
  %513 = vmatmul.f32.gmra.mxu0 %v303
  %v514 = vpop.f32.mrf.mxu0
  %v515 = vadd.f32 0.0, %v514
  %516 = vmatmul.f32.gmra.mxu0 %v306
  %v517 = vpop.f32.mrf.mxu0
  %v518 = vadd.f32 0.0, %v517
  %519 = vmatmul.f32.gmra.mxu0 %v309
  %v520 = vpop.f32.mrf.mxu0
  %v521 = vadd.f32 0.0, %v520
  %522 = vmatmul.f32.gmra.mxu0 %v312
  %v523 = vpop.f32.mrf.mxu0
  %v524 = vadd.f32 0.0, %v523
  %525 = vmatmul.f32.gmra.mxu0 %v315
  %v526 = vpop.f32.mrf.mxu0
  %v527 = vadd.f32 0.0, %v526
  %528 = vmatmul.f32.gmra.mxu0 %v318
  %v529 = vpop.f32.mrf.mxu0
  %v530 = vadd.f32 0.0, %v529
  %531 = vmatmul.f32.gmra.mxu0 %v321
  %v532 = vpop.f32.mrf.mxu0
  %v533 = vadd.f32 0.0, %v532
  %534 = vmatmul.f32.gmra.mxu0 %v324
  %v535 = vpop.f32.mrf.mxu0
  %v536 = vadd.f32 0.0, %v535
  %537 = vmatmul.f32.gmra.mxu0 %v327
  %v538 = vpop.f32.mrf.mxu0
  %v539 = vadd.f32 0.0, %v538
  %540 = vmatmul.f32.gmra.mxu0 %v330
  %v541 = vpop.f32.mrf.mxu0
  %v542 = vadd.f32 0.0, %v541
  %543 = vmatmul.f32.gmra.mxu0 %v333
  %v544 = vpop.f32.mrf.mxu0
  %v545 = vadd.f32 0.0, %v544
  %546 = vmatmul.f32.gmra.mxu0 %v336
  %v547 = vpop.f32.mrf.mxu0
  %v548 = vadd.f32 0.0, %v547
  %549 = vmatmul.f32.gmra.mxu0 %v339
  %v550 = vpop.f32.mrf.mxu0
  %v551 = vadd.f32 0.0, %v550
  %552 = vmatmul.f32.gmra.mxu0 %v342
  %v553 = vpop.f32.mrf.mxu0
  %v554 = vadd.f32 0.0, %v553
  %555 = vmatmul.f32.gmra.mxu0 %v345
  %v556 = vpop.f32.mrf.mxu0
  %v557 = vadd.f32 0.0, %v556
  %558 = vmatmul.f32.gmra.mxu0 %v348
  %v559 = vpop.f32.mrf.mxu0
  %v560 = vadd.f32 0.0, %v559
  %561 = vmatmul.f32.gmra.mxu0 %v351
  %v562 = vpop.f32.mrf.mxu0
  %v563 = vadd.f32 0.0, %v562
  %564 = vmatmul.f32.gmra.mxu0 %v354
  %v565 = vpop.f32.mrf.mxu0
  %v566 = vadd.f32 0.0, %v565
  %567 = vmatmul.f32.gmra.mxu0 %v357
  %v568 = vpop.f32.mrf.mxu0
  %v569 = vadd.f32 0.0, %v568
  %570 = vmatmul.f32.gmra.mxu0 %v360
  %v571 = vpop.f32.mrf.mxu0
  %v572 = vadd.f32 0.0, %v571
  %573 = vdwg.mxu0
  %574 = vxpose.xlu0.b32.start [1/16] %v383, 128
  %575 = vxpose.xlu0.b32.cont [2/16] %v386, 128
  %576 = vxpose.xlu0.b32.cont [3/16] %v389, 128
  %577 = vxpose.xlu0.b32.cont [4/16] %v392, 128
  %578 = vxpose.xlu0.b32.cont [5/16] %v395, 128
  %579 = vxpose.xlu0.b32.cont [6/16] %v398, 128
  %580 = vxpose.xlu0.b32.cont [7/16] %v401, 128
  %581 = vxpose.xlu0.b32.cont [8/16] %v404, 128
  %582 = vxpose.xlu0.b32.cont [9/16] %v407, 128
  %583 = vxpose.xlu0.b32.cont [10/16] %v410, 128
  %584 = vxpose.xlu0.b32.cont [11/16] %v413, 128
  %585 = vxpose.xlu0.b32.cont [12/16] %v416, 128
  %586 = vxpose.xlu0.b32.cont [13/16] %v419, 128
  %587 = vxpose.xlu0.b32.cont [14/16] %v422, 128
  %588 = vxpose.xlu0.b32.cont [15/16] %v425, 128
  %589 = vxpose.xlu0.b32.end [16/16] %v428, 128
  %v590 = vpop.trf.xlu0
  %v591 = vpop.trf.xlu0
  %v592 = vpop.trf.xlu0
  %v593 = vpop.trf.xlu0
  %v594 = vpop.trf.xlu0
  %v595 = vpop.trf.xlu0
  %v596 = vpop.trf.xlu0
  %v597 = vpop.trf.xlu0
  %v598 = vpop.trf.xlu0
  %v599 = vpop.trf.xlu0
  %v600 = vpop.trf.xlu0
  %v601 = vpop.trf.xlu0
  %v602 = vpop.trf.xlu0
  %v603 = vpop.trf.xlu0
  %v604 = vpop.trf.xlu0
  %v605 = vpop.trf.xlu0
  %606 = vxpose.xlu0.b32.start [1/16] %v431, 128
  %607 = vxpose.xlu0.b32.cont [2/16] %v434, 128
  %608 = vxpose.xlu0.b32.cont [3/16] %v437, 128
  %609 = vxpose.xlu0.b32.cont [4/16] %v440, 128
  %610 = vxpose.xlu0.b32.cont [5/16] %v443, 128
  %611 = vxpose.xlu0.b32.cont [6/16] %v446, 128
  %612 = vxpose.xlu0.b32.cont [7/16] %v449, 128
  %613 = vxpose.xlu0.b32.cont [8/16] %v452, 128
  %614 = vxpose.xlu0.b32.cont [9/16] %v455, 128
  %615 = vxpose.xlu0.b32.cont [10/16] %v458, 128
  %616 = vxpose.xlu0.b32.cont [11/16] %v461, 128
  %617 = vxpose.xlu0.b32.cont [12/16] %v464, 128
  %618 = vxpose.xlu0.b32.cont [13/16] %v467, 128
  %619 = vxpose.xlu0.b32.cont [14/16] %v470, 128
  %620 = vxpose.xlu0.b32.cont [15/16] %v473, 128
  %621 = vxpose.xlu0.b32.end [16/16] %v476, 128
  %v622 = vpop.trf.xlu0
  %v623 = vpop.trf.xlu0
  %v624 = vpop.trf.xlu0
  %v625 = vpop.trf.xlu0
  %v626 = vpop.trf.xlu0
  %v627 = vpop.trf.xlu0
  %v628 = vpop.trf.xlu0
  %v629 = vpop.trf.xlu0
  %v630 = vpop.trf.xlu0
  %v631 = vpop.trf.xlu0
  %v632 = vpop.trf.xlu0
  %v633 = vpop.trf.xlu0
  %v634 = vpop.trf.xlu0
  %v635 = vpop.trf.xlu0
  %v636 = vpop.trf.xlu0
  %v637 = vpop.trf.xlu0
  %638 = vxpose.xlu0.b32.start [1/16] %v479, 128
  %639 = vxpose.xlu0.b32.cont [2/16] %v482, 128
  %640 = vxpose.xlu0.b32.cont [3/16] %v485, 128
  %641 = vxpose.xlu0.b32.cont [4/16] %v488, 128
  %642 = vxpose.xlu0.b32.cont [5/16] %v491, 128
  %643 = vxpose.xlu0.b32.cont [6/16] %v494, 128
  %644 = vxpose.xlu0.b32.cont [7/16] %v497, 128
  %645 = vxpose.xlu0.b32.cont [8/16] %v500, 128
  %646 = vxpose.xlu0.b32.cont [9/16] %v503, 128
  %647 = vxpose.xlu0.b32.cont [10/16] %v506, 128
  %648 = vxpose.xlu0.b32.cont [11/16] %v509, 128
  %649 = vxpose.xlu0.b32.cont [12/16] %v512, 128
  %650 = vxpose.xlu0.b32.cont [13/16] %v515, 128
  %651 = vxpose.xlu0.b32.cont [14/16] %v518, 128
  %652 = vxpose.xlu0.b32.cont [15/16] %v521, 128
  %653 = vxpose.xlu0.b32.end [16/16] %v524, 128
  %v654 = vpop.trf.xlu0
  %v655 = vpop.trf.xlu0
  %v656 = vpop.trf.xlu0
  %v657 = vpop.trf.xlu0
  %v658 = vpop.trf.xlu0
  %v659 = vpop.trf.xlu0
  %v660 = vpop.trf.xlu0
  %v661 = vpop.trf.xlu0
  %v662 = vpop.trf.xlu0
  %v663 = vpop.trf.xlu0
  %v664 = vpop.trf.xlu0
  %v665 = vpop.trf.xlu0
  %v666 = vpop.trf.xlu0
  %v667 = vpop.trf.xlu0
  %v668 = vpop.trf.xlu0
  %v669 = vpop.trf.xlu0
  %670 = vxpose.xlu0.b32.start [1/16] %v527, 128
  %671 = vxpose.xlu0.b32.cont [2/16] %v530, 128
  %672 = vxpose.xlu0.b32.cont [3/16] %v533, 128
  %673 = vxpose.xlu0.b32.cont [4/16] %v536, 128
  %674 = vxpose.xlu0.b32.cont [5/16] %v539, 128
  %675 = vxpose.xlu0.b32.cont [6/16] %v542, 128
  %676 = vxpose.xlu0.b32.cont [7/16] %v545, 128
  %677 = vxpose.xlu0.b32.cont [8/16] %v548, 128
  %678 = vxpose.xlu0.b32.cont [9/16] %v551, 128
  %679 = vxpose.xlu0.b32.cont [10/16] %v554, 128
  %680 = vxpose.xlu0.b32.cont [11/16] %v557, 128
  %681 = vxpose.xlu0.b32.cont [12/16] %v560, 128
  %682 = vxpose.xlu0.b32.cont [13/16] %v563, 128
  %683 = vxpose.xlu0.b32.cont [14/16] %v566, 128
  %684 = vxpose.xlu0.b32.cont [15/16] %v569, 128
  %685 = vxpose.xlu0.b32.end [16/16] %v572, 128
  %v686 = vpop.trf.xlu0
  %v687 = vpop.trf.xlu0
  %v688 = vpop.trf.xlu0
  %v689 = vpop.trf.xlu0
  %v690 = vpop.trf.xlu0
  %v691 = vpop.trf.xlu0
  %v692 = vpop.trf.xlu0
  %v693 = vpop.trf.xlu0
  %v694 = vpop.trf.xlu0
  %v695 = vpop.trf.xlu0
  %v696 = vpop.trf.xlu0
  %v697 = vpop.trf.xlu0
  %v698 = vpop.trf.xlu0
  %v699 = vpop.trf.xlu0
  %v700 = vpop.trf.xlu0
  %v701 = vpop.trf.xlu0
  %vm702 = vcmask 1043456
  %v703 = vsel %vm702, %v590, 0.0
  %v704 = vsel %vm702, %v622, 0.0
  %v705 = vadd.f32 %v703, %v704
  %v706 = vsel %vm702, %v654, 0.0
  %v707 = vadd.f32 %v705, %v706
  %v708 = vsel %vm702, %v686, 0.0
  %v709 = vadd.f32 %v707, %v708
  %710 = vadd.xlane.f32.xlu0 %v709
  %v711 = vpop.xlane.xlu0 %710
  %v712 = vrcp.pop 512.0
  %v713 = vmul.f32 512.0, %v712
  %v714 = vsub.f32 1.0, %v713
  %v715 = vmul.f32 %v712, %v714
  %v716 = vadd.f32 %v712, %v715
  %vm717 = vweird.f32 %v712
  %v718 = vsel %vm717, %v712, %v716
  %v719 = vmul.f32 %v711, %v718
  %v720 = vmul.f32 %v590, %v590
  %v721 = vmul.f32 %v622, %v622
  %v722 = vmul.f32 %v654, %v654
  %v723 = vmul.f32 %v686, %v686
  %v724 = vsel %vm702, %v720, 0.0
  %v725 = vsel %vm702, %v721, 0.0
  %v726 = vadd.f32 %v724, %v725
  %v727 = vsel %vm702, %v722, 0.0
  %v728 = vadd.f32 %v726, %v727
  %v729 = vsel %vm702, %v723, 0.0
  %v730 = vadd.f32 %v728, %v729
  %731 = vadd.xlane.f32.xlu0 %v730
  %v732 = vpop.xlane.xlu0 %731
  %v733 = vmul.f32 %v732, %v718
  %v734 = vmul.f32 %v719, %v719
  %v735 = vsub.f32 %v733, %v734
  %v736 = vsub.f32 %v590, %v719
  %v737 = vsub.f32 %v622, %v719
  %v738 = vsub.f32 %v654, %v719
  %v739 = vsub.f32 %v686, %v719
  %v740 = vadd.f32 %v735, 1e-05
  %v741 = vrsqrt.pop %v740
  %v742 = vmul.f32 %v741, %v740
  %v743 = vmul.f32 %v742, %v741
  %v744 = vmul.f32 0.5, %v743
  %v745 = vsub.f32 1.5, %v744
  %v746 = vmul.f32 %v741, %v745
  %vm747 = vweird.f32 %v740
  %vm748 = vweird.f32 %v741
  %vm749 = vmor %vm747, %vm748
  %v750 = vsel %vm749, %v741, %v746
  %v751 = vmul.f32 %v736, %v750
  %v752 = vmul.f32 %v737, %v750
  %v753 = vmul.f32 %v738, %v750
  %v754 = vmul.f32 %v739, %v750
  %v755 = vld [vmem:[%s2] sm:$0xf]
  %757 = vset.pattern.permute.xlu0 0
  %758 = vperm.xlu0 %757, %v755
  %v759 = vpop.permute.xlu0 %758
  %v761 = vmul.f32 %v751, %v759
  %v762 = vmul.f32 %v752, %v759
  %v763 = vmul.f32 %v753, %v759
  %v764 = vmul.f32 %v754, %v759
  %v765 = vld [vmem:[%s3] sm:$0xf]
  %767 = vset.pattern.permute.xlu0 0
  %768 = vperm.xlu0 %767, %v765
  %v769 = vpop.permute.xlu0 %768
  %v771 = vadd.f32 %v761, %v769
  %v772 = vadd.f32 %v762, %v769
  %v773 = vadd.f32 %v763, %v769
  %v774 = vadd.f32 %v764, %v769
  %v775 = vmax.f32 %v771, 0.0
  %v776 = vmax.f32 %v772, 0.0
  %v777 = vmax.f32 %v773, 0.0
  %v778 = vmax.f32 %v774, 0.0
  %v779 = vld [vmem:[%s4] sm:$0xff]
  %v780 = vld [vmem:[%s4 + $0x8] sm:$0xff]
  %783 = vst [vmem:[#allocation1] ss:$2 sm:$0xff] %v779
  %v784 = vld.sshfl [vmem:[#allocation1] sm:$0xff pattern:$0x75316420]
  %v785 = vld.sshfl [vmem:[#allocation1 + $0x8] sm:$0xff pattern:$0x75316420]
  %s786 = scalar_lea.vmem [#allocation1], 16
  %787 = vst [vmem:[%s786] ss:$2 sm:$0xff] %v780
  %v788 = vld.sshfl [vmem:[#allocation1 + $0x10] sm:$0xff pattern:$0x75316420]
  %v789 = vld.sshfl [vmem:[#allocation1 + $0x18] sm:$0xff pattern:$0x75316420]
  %v794 = vadd.f32 %v775, %v784
  %v795 = vadd.f32 %v776, %v785
  %v796 = vadd.f32 %v777, %v788
  %v797 = vadd.f32 %v778, %v789
  %v802 = vrot.slane %v795, 4
  %v803 = vrot.slane %v797, 4
  %v804 = vsel %vm702, %v794, %v802
  %v805 = vsel %vm702, %v796, %v803
  %808 = vst [vmem:[%s5] sm:$0xff] %v804
  %809 = vst [vmem:[%s5 + $0x8] sm:$0xff] %v805
  // Predicated region
  $region22: #{resblock_forward.1} parent=0 // pred_check
    _
  $region23: #{resblock_forward.1} parent=0 // pred_check_branch
    %811 = sbr.rel (0) target = $region25
  $region24: #{resblock_forward.1} parent=0 // pred_region
    _
  $region25: #{resblock_forward.1} parent=0 // pred_fallthru
    _
  // Predicated region
  $region26: #{resblock_forward.1} parent=0 // pred_check
    _
  $region27: #{resblock_forward.1} parent=0 // pred_check_branch
    %813 = sbr.rel (0) target = $region29
  $region28: #{resblock_forward.1} parent=0 // pred_region
    _
  $region29: #{resblock_forward.1} parent=0 // pred_fallthru
    _

</llo_original>
